<compile_context>
chip_gen: v6e
topology: v6e:2x2x1
jax: 0.10.0
libtpu: 0.0.40
codegen_flags: <defaults>
</compile_context>

<pallas_src>
import jax
import jax.numpy as jnp
from jax.experimental import pallas as pl
from jax.experimental.pallas import tpu as pltpu


def _categorical_kernel(logp_ref, bits_ref, out_ref):
    # logp_ref: (TB, N) block of log-probabilities (any float dtype) in VMEM
    # bits_ref: (TB, N) block of uniform uint32 random bits in VMEM
    # out_ref : (TB, 1) block of sampled indices (int32) in VMEM
    logp = logp_ref[...].astype(jnp.float32)  # bf16 inputs welcome; compute in f32
    bits = bits_ref[...]

    # Uniform(0,1) from the top 24 bits (strictly inside (0,1)).
    u = (jnp.right_shift(bits, 8).astype(jnp.float32) + 0.5) * (1.0 / (1 << 24))
    g = -jnp.log(-jnp.log(u))  # Gumbel(0,1) noise

    # Gumbel-max: argmax_i (log_p_i + g_i) ~ Categorical(exp(log_p)/sum)
    scores = logp + g
    m = jnp.max(scores, axis=-1, keepdims=True)
    n = scores.shape[-1]
    col = jax.lax.broadcasted_iota(jnp.int32, scores.shape, 1)
    idx = jnp.min(jnp.where(scores == m, col, n), axis=-1, keepdims=True)

    out_ref[...] = idx.astype(jnp.int32)


def categorical_sample(log_p, key, *, tile_b=256):
    """Pallas equivalent of torch.multinomial(log_p.exp(), 1).long().squeeze(1).

    tile_b is the batch-tile tuning knob (clamped to the batch size). Large
    tiles amortize the ~0.35 us/grid-step overhead; the grid axis is marked
    "parallel" so Mosaic can shard tiles across TensorCores (v7x megacore).
    """
    B, N = log_p.shape
    tile_b = min(tile_b, B)
    assert B % tile_b == 0, "batch must be a multiple of the batch tile"

    # Uniform random bits (one word per (row, category)), consumed in-kernel.
    bits = jax.random.bits(key, (B, N), dtype=jnp.uint32)

    # TODO(synk): for very large N (>= ~32K) add a second ("arbitrary") grid
    # axis over N with a running (max_score, argmax) VMEM accumulator so that
    # tile_b stays large while each block fits v7x's 64 MiB VMEM.
    out = pl.pallas_call(
        _categorical_kernel,
        out_shape=jax.ShapeDtypeStruct((B, 1), jnp.int32),
        grid_spec=pltpu.PrefetchScalarGridSpec(
            num_scalar_prefetch=0,
            grid=(B // tile_b,),
            in_specs=[
                pl.BlockSpec((tile_b, N), lambda i: (i, 0)),
                pl.BlockSpec((tile_b, N), lambda i: (i, 0)),
            ],
            out_specs=pl.BlockSpec((tile_b, 1), lambda i: (i, 0)),
        ),
        compiler_params=pltpu.CompilerParams(
            dimension_semantics=("parallel",),
        ),
    )(log_p, bits)

    return out[:, 0]  # squeeze(1) -> shape (B,)


if __name__ == "__main__":
    key = jax.random.PRNGKey(0)
    k_logits, k_sample = jax.random.split(key)

    B, N = 8, 128  # small shapes: batch of 8 rows, 128 categories
    logits = jax.random.normal(k_logits, (B, N), dtype=jnp.float32)
    log_p = jax.nn.log_softmax(logits, axis=-1)  # valid log-probabilities

    samples = categorical_sample(log_p, k_sample)
    samples = jax.block_until_ready(samples)

    assert samples.shape == (B,)
    assert samples.dtype == jnp.int32
    assert bool(jnp.all((samples >= 0) & (samples < N)))

    print("KERNEL_OK")
</pallas_src>

<mosaic_0001>
module attributes {stable_mosaic.version = 11 : i64} {
  func.func @_categorical_kernel(%arg0: i32, %arg1: memref<8x128xf32, #tpu.memory_space<vmem>>, %arg2: memref<8x128xi32, #tpu.memory_space<vmem>>, %arg3: memref<8x1xi32, #tpu.memory_space<vmem>>) attributes {dimension_semantics = [#tpu.dimension_semantics<parallel>], iteration_bounds = array<i64: 1>, scalar_prefetch = 0 : i64, scratch_operands = 0 : i64, tpu.core_type = #tpu.core_type<tc>, window_params = [{transform_indices = @transform_0, window_bounds = array<i64: 8, 128>}, {transform_indices = @transform_1, window_bounds = array<i64: 8, 128>}, {transform_indices = @transform_2, window_bounds = array<i64: 8, 1>}]} {
    %c0 = arith.constant 0 : index
    %c0_0 = arith.constant 0 : index
    %0 = vector.load %arg1[%c0, %c0_0] : memref<8x128xf32, #tpu.memory_space<vmem>>, vector<8x128xf32>
    %c0_1 = arith.constant 0 : index
    %c0_2 = arith.constant 0 : index
    %1 = vector.load %arg2[%c0_1, %c0_2] : memref<8x128xi32, #tpu.memory_space<vmem>>, vector<8x128xi32>
    %c8_i32 = arith.constant 8 : i32
    %2 = vector.broadcast %c8_i32 : i32 to vector<8x128xi32>
    %3 = arith.shrui %1, %2 : vector<8x128xi32>
    %4 = arith.uitofp %3 : vector<8x128xi32> to vector<8x128xf32>
    %cst = arith.constant 5.000000e-01 : f32
    %5 = vector.broadcast %cst : f32 to vector<8x128xf32>
    %6 = arith.addf %4, %5 : vector<8x128xf32>
    %cst_3 = arith.constant 5.96046448E-8 : f32
    %7 = vector.broadcast %cst_3 : f32 to vector<8x128xf32>
    %8 = arith.mulf %6, %7 : vector<8x128xf32>
    %9 = math.log %8 : vector<8x128xf32>
    %cst_4 = arith.constant 0.000000e+00 : f32
    %10 = vector.broadcast %cst_4 : f32 to vector<8x128xf32>
    %11 = arith.subf %10, %9 : vector<8x128xf32>
    %12 = math.log %11 : vector<8x128xf32>
    %cst_5 = arith.constant 0.000000e+00 : f32
    %13 = vector.broadcast %cst_5 : f32 to vector<8x128xf32>
    %14 = arith.subf %13, %12 : vector<8x128xf32>
    %15 = arith.addf %0, %14 : vector<8x128xf32>
    %cst_6 = arith.constant dense<0xFF800000> : vector<8xf32>
    %16 = vector.multi_reduction <maximumf>, %15, %cst_6 [1] : vector<8x128xf32> to vector<8xf32>
    %17 = vector.shape_cast %16 : vector<8xf32> to vector<8x1xf32>
    %18 = tpu.iota {dimensions = array<i32: 1>} : vector<8x128xi32>
    %19 = vector.broadcast %17 : vector<8x1xf32> to vector<8x128xf32>
    %20 = arith.cmpf oeq, %15, %19 : vector<8x128xf32>
    %c128_i32 = arith.constant 128 : i32
    %21 = vector.broadcast %c128_i32 : i32 to vector<8x128xi32>
    %22 = arith.select %20, %18, %21 : vector<8x128xi1>, vector<8x128xi32>
    %cst_7 = arith.constant dense<2147483647> : vector<8xi32>
    %23 = vector.multi_reduction <minsi>, %22, %cst_7 [1] : vector<8x128xi32> to vector<8xi32>
    %24 = vector.shape_cast %23 : vector<8xi32> to vector<8x1xi32>
    %c0_8 = arith.constant 0 : index
    %c0_9 = arith.constant 0 : index
    %25 = vector.load %arg3[%c0_8, %c0_9] : memref<8x1xi32, #tpu.memory_space<vmem>>, vector<8x1xi32>
    tpu.vector_store %arg3[%c0_8, %c0_9], %24 {strides = array<i32>} : memref<8x1xi32, #tpu.memory_space<vmem>>, vector<8x1xi32>,
    return
  }
  func.func @transform_0(%arg0: i32) -> (i32, i32) {
    %c0_i32 = arith.constant 0 : i32
    %c0_i32_0 = arith.constant 0 : i32
    return %arg0, %c0_i32 : i32, i32
  }
  func.func @transform_1(%arg0: i32) -> (i32, i32) {
    %c0_i32 = arith.constant 0 : i32
    %c0_i32_0 = arith.constant 0 : i32
    return %arg0, %c0_i32 : i32, i32
  }
  func.func @transform_2(%arg0: i32) -> (i32, i32) {
    %c0_i32 = arith.constant 0 : i32
    %c0_i32_0 = arith.constant 0 : i32
    return %arg0, %c0_i32 : i32, i32
  }
}

</mosaic_0001>

<llo_original>
// kernel: tpu_custom_call.1
$region0: #{tpu_custom_call.1}
  #allocation0 [shape = 'u32[]', space=smem, size = 0x4, offset = 0x4, fixed_abs, tag = 'smem constant byte address 0x4 - core index']
  #allocation1 [shape = 'u32[144,128]{1,0:T(1,128)}', space=vmem, size = 0x12000, scoped, tag = 'internal scratch']
  %s0 = inlined_call_operand.hbm [shape: f32[8,128], index: 0, kind: input, shape index: {}]
  %s1 = inlined_call_operand.hbm [shape: u32[8,128], index: 1, kind: input, shape index: {}]
  %s2 = inlined_call_operand.vmem [shape: s32[8,1], index: 2, kind: output, shape index: {}]
  %s3 = sld [smem:[#allocation0]]
  $region26: #{tpu_custom_call.1} parent=0
    _
  %s5 = ssub.s32 1, %s3
  %s6 = scalar_select 0, %s5, %s3
  $region1: #{tpu_custom_call.1} parent=0
    #allocation2 [shape = 'u8[4096]{0}', space=vmem, size = 0x1000, scoped, tag = 'input window, operand 0, single buffered']
    #allocation3 [shape = 's32[1]{0}', space=sflag, size = 0x4, scoped, tag = 'scoped memory for tpu_custom_call.1']
    #allocation4 [shape = 'u8[4096]{0}', space=vmem, size = 0x1000, scoped, tag = 'input window, operand 1, single buffered']
    #allocation5 [shape = 's32[1]{0}', space=sflag, size = 0x4, scoped, tag = 'scoped memory for tpu_custom_call.1']
    %7 = vsyncpa [#allocation3], 0
    %8 = vsyncpa [#allocation5], 0
    // Predicated region
    $region2: #{tpu_custom_call.1} parent=1 // pred_check
      _
    $region3: #{tpu_custom_call.1} parent=1 // pred_check_branch
      %10 = sbr.rel (0) target = $region5
    $region4: #{tpu_custom_call.1} parent=1 // pred_region
      %s12 = ssub.s32 128, 128
      %13 = vsyncadd [#allocation3], %s12
      %s15 = sshll.u32 [#allocation2], 4
      %s16 = int_to_ptr.vmem [resolvable:$true] %s15
      %18 = dma.hbm_to_vmem [thread:$0]  %s0, 128, %s16, [#allocation3]
    $region5: #{tpu_custom_call.1} parent=1 // pred_fallthru
      _
    // Predicated region
    $region6: #{tpu_custom_call.1} parent=1 // pred_check
      _
    $region7: #{tpu_custom_call.1} parent=1 // pred_check_branch
      %20 = sbr.rel (0) target = $region9
    $region8: #{tpu_custom_call.1} parent=1 // pred_region
      %s22 = ssub.s32 128, 128
      %23 = vsyncadd [#allocation5], %s22
      %s25 = sshll.u32 [#allocation4], 4
      %s26 = int_to_ptr.vmem [resolvable:$true] %s25
      %28 = dma.hbm_to_vmem [thread:$0]  %s1, 128, %s26, [#allocation5]
    $region9: #{tpu_custom_call.1} parent=1 // pred_fallthru
      _
    // Predicated region
    $region10: #{tpu_custom_call.1} parent=1 // pred_check
      _
    $region11: #{tpu_custom_call.1} parent=1 // pred_check_branch
      %30 = sbr.rel (0) target = $region13
    $region12: #{tpu_custom_call.1} parent=1 // pred_region
      %31 = dma.done [#allocation3], 128
    $region13: #{tpu_custom_call.1} parent=1 // pred_fallthru
      _
    // Predicated region
    $region14: #{tpu_custom_call.1} parent=1 // pred_check
      _
    $region15: #{tpu_custom_call.1} parent=1 // pred_check_branch
      %33 = sbr.rel (0) target = $region17
    $region16: #{tpu_custom_call.1} parent=1 // pred_region
      %34 = dma.done [#allocation5], 128
    $region17: #{tpu_custom_call.1} parent=1 // pred_fallthru
      _
    %v35 = vld [vmem:[#allocation2] sm:$0xff]
    %v36 = vld [vmem:[#allocation4] sm:$0xff]
    %v37 = vshrl.u32 %v36, 8
    %v38 = vshrl.u32 %v37, 16
    %v39 = vand.u32 %v37, 65535
    %v40 = vcvt.s32.f32 %v38
    %v41 = vmul.f32 %v40, 65536.0
    %v42 = vcvt.s32.f32 %v39
    %v43 = vadd.f32 %v41, %v42
    %v44 = vadd.f32 %v43, 0.5
    %v45 = vmul.f32 %v44, 5.9604645e-08
    %v46 = vlog2.pop %v45
    %v47 = vmul.f32 %v46, 0.6931472
    %v48 = vsub.f32 0.0, %v47
    %v49 = vlog2.pop %v48
    %v50 = vmul.f32 %v49, 0.6931472
    %v51 = vsub.f32 0.0, %v50
    %v52 = vadd.f32 %v35, %v51
    %53 = vmax.xlane.f32.xlu0 %v52
    %v54 = vpop.xlane.xlu0 %53
    %v55 = vlaneseq
    %v56 = vand.u32 %v55, 127
    %vm57 = vcmp.eq.f32.partialorder %v52, %v54
    %v58 = vsel %vm57, %v56, 128
    %v59 = vand.u32 %v58, 65535
    %v60 = vshra.s32 %v58, 16
    %v61 = vcvt.s32.f32 %v59
    %v62 = vcvt.s32.f32 %v60
    %63 = vmin.xlane.f32.xlu0 %v62
    %v64 = vpop.xlane.xlu0 %63
    %vm65 = vcmp.eq.f32.partialorder %v62, %v64
    %v66 = vsel %vm65, %v61, inf
    %67 = vmin.xlane.f32.xlu0 %v66
    %v68 = vpop.xlane.xlu0 %67
    %v69 = vcvt.f32.s32 %v68
    %v70 = vcvt.f32.s32 %v64
    %v71 = vshll.u32 %v70, 16
    %v72 = vadd.s32 %v71, %v69
    %vm73 = vcmask 7168
    %74 = vst.msk [vmem:[%s2] sm:$0xff] %vm73, %v72
    // Predicated region
    $region18: #{tpu_custom_call.1} parent=1 // pred_check
      _
    $region19: #{tpu_custom_call.1} parent=1 // pred_check_branch
      %76 = sbr.rel (0) target = $region21
    $region20: #{tpu_custom_call.1} parent=1 // pred_region
      _
    $region21: #{tpu_custom_call.1} parent=1 // pred_fallthru
      _
    // Predicated region
    $region22: #{tpu_custom_call.1} parent=1 // pred_check
      _
    $region23: #{tpu_custom_call.1} parent=1 // pred_check_branch
      %78 = sbr.rel (0) target = $region25
    $region24: #{tpu_custom_call.1} parent=1 // pred_region
      _
    $region25: #{tpu_custom_call.1} parent=1 // pred_fallthru
      _
    %79 = vsyncpa [#allocation3], 1
    %80 = vsyncpa [#allocation5], 1

</llo_original>
